<compile_context>
chip_gen: v7x
topology: tpu7x:2x2x1
jax: 0.10.0
libtpu: 0.0.40
codegen_flags: <defaults>
</compile_context>

<pallas_src>
import functools

import jax
import jax.numpy as jnp
from jax.experimental import pallas as pl
from jax.experimental.pallas import tpu as pltpu


def _round_up(x, m):
    return (x + m - 1) // m * m


def _round_down(x, m):
    return (x // m) * m


def _vmem_capacity_bytes():
    """Per-TensorCore VMEM capacity; conservative fallback if unqueryable."""
    try:
        info = pltpu.get_tpu_info()
        cap = getattr(info, "vmem_capacity_bytes", None)
        if cap:
            return int(cap)
    except Exception:
        pass
    return 64 * 1024 * 1024  # v7x-sized (smallest) -> safe everywhere


def _mask_loss_kernel(p_ref, t_ref, m_ref, num_ref, *, tile_v):
    j = pl.program_id(1)                       # vocab-block index (reduction)

    p = p_ref[...].astype(jnp.float32)         # (tile_n, tile_v), native dtype streamed
    t = t_ref[...]                             # (tile_n, 1) int32
    m = m_ref[...]                             # (tile_n, 1) float32

    # gather(predicts, 1, targets) restricted to this vocab block:
    # one vselect per vreg + an XLU lane reduction.  Localize the target once
    # per step instead of adding j*tile_v to every iota element.
    t_local = t - j * tile_v
    vocab_ids = jax.lax.broadcasted_iota(jnp.int32, p.shape, 1)
    gathered = jnp.sum(jnp.where(vocab_ids == t_local, p, 0.0),
                       axis=1, keepdims=True)  # (tile_n, 1)

    # Rows past N (ragged last row block) contain unspecified data but always
    # carry mask == 0; the where() keeps even NaN/Inf garbage from leaking.
    contrib = jnp.where(m != 0, (-gathered) * m, 0.0)

    # The output block is resident across the whole j axis (its index_map
    # ignores j), so accumulate the vocab reduction directly into it.
    @pl.when(j == 0)
    def _():
        num_ref[...] = contrib

    @pl.when(j != 0)
    def _():
        num_ref[...] = num_ref[...] + contrib


def mask_criterion(predicts, targets, masks, *, tile_n=None, tile_v=None):
    """predicts: (B, T, V) log-probs (any float dtype); targets: (B, T) int; masks: (B, T)."""
    B, T, V = predicts.shape
    N = B * T
    elt = jnp.dtype(predicts.dtype).itemsize

    vmem_cap = _vmem_capacity_bytes()
    if vmem_cap >= 96 * 1024 * 1024:           # v5e / v6e: 128 MiB VMEM
        per_buf = 32 * 1024 * 1024             # predicts bytes per pipeline buffer
        vmem_limit = 96 * 1024 * 1024
    else:                                       # v7x: 64 MiB VMEM (or unknown)
        per_buf = 16 * 1024 * 1024
        vmem_limit = 56 * 1024 * 1024

    n8 = _round_up(N, 8)

    # Vocab tile: prefer a single full-vocab block (removes the reduction
    # axis); otherwise a lane-dense multiple of 128 (last block may be ragged).
    if tile_v is None:
        if V * elt * min(256, n8) <= per_buf:
            tile_v = V
        else:
            tile_v = min(8192, _round_up(V, 128))
    else:
        tile_v = min(int(tile_v), V)
        if tile_v != V:
            tile_v = max(128, _round_down(tile_v, 128))

    # Row tile: fill the per-buffer budget (double-buffered by the pipeline),
    # capped at 1024 rows.
    if tile_n is None:
        tile_n = min(1024, _round_down(per_buf // (tile_v * elt), 8))
    else:
        tile_n = _round_down(int(tile_n), 8)
    tile_n = max(8, min(tile_n, n8))

    grid_i = pl.cdiv(N, tile_n)
    grid_j = pl.cdiv(V, tile_v)
    n_pad = grid_i * tile_n

    # predicts: stream in place — no pad, no astype (reshape of contiguous
    # (B,T,V) is free).  Only the cheap (N,) vectors get padded.
    p2 = predicts.reshape(N, V)
    t2 = targets.reshape(N).astype(jnp.int32)
    m2 = masks.reshape(N).astype(jnp.float32)
    if n_pad != N:
        t2 = jnp.pad(t2, (0, n_pad - N))        # padded rows: target 0
        m2 = jnp.pad(m2, (0, n_pad - N))        # padded rows: mask 0
    t2 = t2.reshape(n_pad, 1)
    m2 = m2.reshape(n_pad, 1)

    num_rows = pl.pallas_call(
        functools.partial(_mask_loss_kernel, tile_v=tile_v),
        out_shape=jax.ShapeDtypeStruct((n_pad, 1), jnp.float32),
        grid_spec=pltpu.PrefetchScalarGridSpec(
            num_scalar_prefetch=0,
            grid=(grid_i, grid_j),
            in_specs=[
                pl.BlockSpec((tile_n, tile_v), lambda i, j: (i, j)),
                pl.BlockSpec((tile_n, 1), lambda i, j: (i, 0)),
                pl.BlockSpec((tile_n, 1), lambda i, j: (i, 0)),
            ],
            out_specs=pl.BlockSpec((tile_n, 1), lambda i, j: (i, 0)),
        ),
        compiler_params=pltpu.CompilerParams(
            dimension_semantics=("parallel", "arbitrary"),
            vmem_limit_bytes=vmem_limit,
        ),
    )(p2, t2, m2)

    # Tiny epilogue: matches sum(-gathered * m) / sum(m).  If sum(masks) == 0
    # this is NaN/Inf, same as the PyTorch reference.
    return jnp.sum(num_rows) / jnp.sum(masks.astype(jnp.float32))


if __name__ == "__main__":
    key = jax.random.PRNGKey(0)

    def reference(predicts, targets, masks):
        V = predicts.shape[-1]
        p2 = predicts.reshape(-1, V).astype(jnp.float32)
        t2 = targets.reshape(-1, 1)
        m2 = masks.reshape(-1, 1).astype(jnp.float32)
        return jnp.sum(-jnp.take_along_axis(p2, t2, axis=1) * m2) / jnp.sum(m2)

    # Case 1: small f32 inputs, single grid step.
    B, T, V = 2, 8, 32
    k1, k2, k3 = jax.random.split(key, 3)
    predicts = jax.nn.log_softmax(
        jax.random.normal(k1, (B, T, V), dtype=jnp.float32), axis=-1)
    targets = jax.random.randint(k2, (B, T), 0, V, dtype=jnp.int32)
    masks = (jax.random.uniform(k3, (B, T)) > 0.3).astype(jnp.float32)
    masks = masks.at[0, 0].set(1.0)            # keep the denominator non-zero

    loss = mask_criterion(predicts, targets, masks)
    jax.block_until_ready(loss)
    ref = reference(predicts, targets, masks)
    assert jnp.allclose(loss, ref, atol=1e-5, rtol=1e-5), (loss, ref)

    # Case 2: bf16 predicts, ragged row/vocab blocks, multi-step vocab reduction.
    B2, T2, V2 = 3, 5, 200
    k4, k5, k6 = jax.random.split(jax.random.PRNGKey(1), 3)
    predicts2 = jax.nn.log_softmax(
        jax.random.normal(k4, (B2, T2, V2), dtype=jnp.float32), axis=-1
    ).astype(jnp.bfloat16)
    targets2 = jax.random.randint(k5, (B2, T2), 0, V2, dtype=jnp.int32)
    masks2 = (jax.random.uniform(k6, (B2, T2)) > 0.4).astype(jnp.float32)
    masks2 = masks2.at[0, 0].set(1.0)

    loss2 = mask_criterion(predicts2, targets2, masks2, tile_n=8, tile_v=128)
    jax.block_until_ready(loss2)
    ref2 = reference(predicts2, targets2, masks2)
    assert jnp.allclose(loss2, ref2, atol=1e-5, rtol=1e-5), (loss2, ref2)

    print("KERNEL_OK")
</pallas_src>

<mosaic_0001>
module attributes {stable_mosaic.version = 11 : i64} {
  func.func @_mask_loss_kernel(%arg0: i32, %arg1: i32, %arg2: memref<16x32xf32, #tpu.memory_space<vmem>>, %arg3: memref<16x1xi32, #tpu.memory_space<vmem>>, %arg4: memref<16x1xf32, #tpu.memory_space<vmem>>, %arg5: memref<16x1xf32, #tpu.memory_space<vmem>>) attributes {dimension_semantics = [#tpu.dimension_semantics<parallel>, #tpu.dimension_semantics<arbitrary>], iteration_bounds = array<i64: 1, 1>, scalar_prefetch = 0 : i64, scratch_operands = 0 : i64, tpu.core_type = #tpu.core_type<tc>, window_params = [{transform_indices = @transform_0, window_bounds = array<i64: 16, 32>}, {transform_indices = @transform_1, window_bounds = array<i64: 16, 1>}, {transform_indices = @transform_2, window_bounds = array<i64: 16, 1>}, {transform_indices = @transform_3, window_bounds = array<i64: 16, 1>}]} {
    %c0 = arith.constant 0 : index
    %c0_0 = arith.constant 0 : index
    %0 = vector.load %arg2[%c0, %c0_0] : memref<16x32xf32, #tpu.memory_space<vmem>>, vector<16x32xf32>
    %c0_1 = arith.constant 0 : index
    %c0_2 = arith.constant 0 : index
    %1 = vector.load %arg3[%c0_1, %c0_2] : memref<16x1xi32, #tpu.memory_space<vmem>>, vector<16x1xi32>
    %c0_3 = arith.constant 0 : index
    %c0_4 = arith.constant 0 : index
    %2 = vector.load %arg4[%c0_3, %c0_4] : memref<16x1xf32, #tpu.memory_space<vmem>>, vector<16x1xf32>
    %c32_i32 = arith.constant 32 : i32
    %3 = arith.muli %arg1, %c32_i32 : i32
    %4 = vector.broadcast %3 : i32 to vector<16x1xi32>
    %5 = arith.subi %1, %4 : vector<16x1xi32>
    %6 = tpu.iota {dimensions = array<i32: 1>} : vector<16x32xi32>
    %7 = vector.broadcast %5 : vector<16x1xi32> to vector<16x32xi32>
    %8 = arith.cmpi eq, %6, %7 : vector<16x32xi32>
    %cst = arith.constant 0.000000e+00 : f32
    %9 = vector.broadcast %cst : f32 to vector<16x32xf32>
    %10 = arith.select %8, %0, %9 : vector<16x32xi1>, vector<16x32xf32>
    %cst_5 = arith.constant dense<0.000000e+00> : vector<16xf32>
    %11 = vector.multi_reduction <add>, %10, %cst_5 [1] : vector<16x32xf32> to vector<16xf32>
    %12 = vector.shape_cast %11 : vector<16xf32> to vector<16x1xf32>
    %cst_6 = arith.constant 0.000000e+00 : f32
    %13 = vector.broadcast %cst_6 : f32 to vector<16x1xf32>
    %14 = arith.cmpf one, %2, %13 : vector<16x1xf32>
    %cst_7 = arith.constant 0.000000e+00 : f32
    %15 = vector.broadcast %cst_7 : f32 to vector<16x1xf32>
    %16 = arith.subf %15, %12 : vector<16x1xf32>
    %17 = arith.mulf %16, %2 : vector<16x1xf32>
    %cst_8 = arith.constant 0.000000e+00 : f32
    %18 = vector.broadcast %cst_8 : f32 to vector<16x1xf32>
    %19 = arith.select %14, %17, %18 : vector<16x1xi1>, vector<16x1xf32>
    %c0_i32 = arith.constant 0 : i32
    %20 = arith.cmpi eq, %arg1, %c0_i32 : i32
    %21 = arith.extui %20 : i1 to i32
    %c0_i32_9 = arith.constant 0 : i32
    %22 = arith.cmpi ne, %21, %c0_i32_9 : i32
    scf.if %22 {
      %c0_12 = arith.constant 0 : index
      %c0_13 = arith.constant 0 : index
      %26 = vector.load %arg5[%c0_12, %c0_13] : memref<16x1xf32, #tpu.memory_space<vmem>>, vector<16x1xf32>
      tpu.vector_store %arg5[%c0_12, %c0_13], %19 {strides = array<i32>} : memref<16x1xf32, #tpu.memory_space<vmem>>, vector<16x1xf32>,
    } else {
    }
    %c0_i32_10 = arith.constant 0 : i32
    %23 = arith.cmpi ne, %arg1, %c0_i32_10 : i32
    %24 = arith.extui %23 : i1 to i32
    %c0_i32_11 = arith.constant 0 : i32
    %25 = arith.cmpi ne, %24, %c0_i32_11 : i32
    scf.if %25 {
      %c0_12 = arith.constant 0 : index
      %c0_13 = arith.constant 0 : index
      %26 = vector.load %arg5[%c0_12, %c0_13] : memref<16x1xf32, #tpu.memory_space<vmem>>, vector<16x1xf32>
      %27 = arith.addf %26, %19 : vector<16x1xf32>
      %c0_14 = arith.constant 0 : index
      %c0_15 = arith.constant 0 : index
      %28 = vector.load %arg5[%c0_14, %c0_15] : memref<16x1xf32, #tpu.memory_space<vmem>>, vector<16x1xf32>
      tpu.vector_store %arg5[%c0_14, %c0_15], %27 {strides = array<i32>} : memref<16x1xf32, #tpu.memory_space<vmem>>, vector<16x1xf32>,
    } else {
    }
    return
  }
  func.func @transform_0(%arg0: i32, %arg1: i32) -> (i32, i32) {
    %c0_i32 = arith.constant 0 : i32
    return %arg0, %arg1 : i32, i32
  }
  func.func @transform_1(%arg0: i32, %arg1: i32) -> (i32, i32) {
    %c0_i32 = arith.constant 0 : i32
    %c0_i32_0 = arith.constant 0 : i32
    return %arg0, %c0_i32 : i32, i32
  }
  func.func @transform_2(%arg0: i32, %arg1: i32) -> (i32, i32) {
    %c0_i32 = arith.constant 0 : i32
    %c0_i32_0 = arith.constant 0 : i32
    return %arg0, %c0_i32 : i32, i32
  }
  func.func @transform_3(%arg0: i32, %arg1: i32) -> (i32, i32) {
    %c0_i32 = arith.constant 0 : i32
    %c0_i32_0 = arith.constant 0 : i32
    return %arg0, %c0_i32 : i32, i32
  }
}

</mosaic_0001>

<llo_original>
// kernel: tpu_custom_call.1
$region0: #{tpu_custom_call.1}
  #allocation0 [shape = 'u32[]', space=smem, size = 0x4, offset = 0x4, fixed_abs, tag = 'smem constant byte address 0x4 - core index']
  #allocation1 [shape = 'u32[144,128]{1,0:T(1,128)}', space=vmem, size = 0x12000, scoped, tag = 'internal scratch']
  %s0 = inlined_call_operand.vmem [shape: f32[16,32], index: 0, kind: input, shape index: {}]
  %s1 = inlined_call_operand.vmem [shape: s32[16,1], index: 1, kind: input, shape index: {}]
  %s2 = inlined_call_operand.vmem [shape: f32[16,1], index: 2, kind: input, shape index: {}]
  %s3 = inlined_call_operand.vmem [shape: f32[16,1], index: 3, kind: output, shape index: {}]
  %s4 = sld [smem:[#allocation0]]
  $region30: #{tpu_custom_call.1} parent=0
    _
  %s6 = ssub.s32 1, %s4
  %s7 = scalar_select 0, %s6, %s4
  // Predicated region
  $region2: #{tpu_custom_call.1} parent=0 // pred_check
    _
  $region3: #{tpu_custom_call.1} parent=0 // pred_check_branch
    %9 = sbr.rel (0) target = $region5
  $region4: #{tpu_custom_call.1} parent=0 // pred_region
    _
  $region5: #{tpu_custom_call.1} parent=0 // pred_fallthru
    _
  // Predicated region
  $region6: #{tpu_custom_call.1} parent=0 // pred_check
    _
  $region7: #{tpu_custom_call.1} parent=0 // pred_check_branch
    %11 = sbr.rel (0) target = $region9
  $region8: #{tpu_custom_call.1} parent=0 // pred_region
    _
  $region9: #{tpu_custom_call.1} parent=0 // pred_fallthru
    _
  // Predicated region
  $region10: #{tpu_custom_call.1} parent=0 // pred_check
    _
  $region11: #{tpu_custom_call.1} parent=0 // pred_check_branch
    %13 = sbr.rel (0) target = $region13
  $region12: #{tpu_custom_call.1} parent=0 // pred_region
    _
  $region13: #{tpu_custom_call.1} parent=0 // pred_fallthru
    _
  %v14 = vld [vmem:[%s0] sm:$0xff]
  %v15 = vld [vmem:[%s0 + $0x8] sm:$0xff]
  %v16 = vld [vmem:[%s1] sm:$0xff]
  %v17 = vld [vmem:[%s1 + $0x8] sm:$0xff]
  %v18 = vld [vmem:[%s2] sm:$0xff]
  %v19 = vld [vmem:[%s2 + $0x8] sm:$0xff]
  %s20 = smul.u32 0, 32
  %v21 = vstv %s20
  %v22 = vsub.s32 %v16, %v21
  %v23 = vsub.s32 %v17, %v21
  %v24 = vlaneseq
  %v25 = vand.u32 %v24, 127
  %26 = vset.pattern.permute.xlu0 0
  %27 = vperm.xlu0 %26, %v22
  %v28 = vpop.permute.xlu0 %27
  %29 = vset.pattern.permute.xlu0 0
  %30 = vperm.xlu0 %29, %v23
  %v31 = vpop.permute.xlu0 %30
  %vm32 = vcmp.eq.s32.totalorder %v25, %v28
  %vm33 = vcmp.eq.s32.totalorder %v25, %v31
  %v34 = vsel %vm32, %v14, 0.0
  %v35 = vsel %vm33, %v15, 0.0
  %vm36 = vcmask 261120
  %v37 = vsel %vm36, %v34, 0.0
  %38 = vadd.xlane.f32.xlu0 %v37
  %v39 = vpop.xlane.xlu0 %38
  %v40 = vsel %vm36, %v35, 0.0
  %41 = vadd.xlane.f32.xlu0 %v40
  %v42 = vpop.xlane.xlu0 %41
  %vm43 = vcmp.ne.f32.partialorder %v18, 0.0
  %vm44 = vcmp.ne.f32.partialorder %v19, 0.0
  %v45 = vsub.f32 0.0, %v39
  %v46 = vsub.f32 0.0, %v42
  %v47 = vmul.f32 %v45, %v18
  %v48 = vmul.f32 %v46, %v19
  %v49 = vsel %vm43, %v47, 0.0
  %v50 = vsel %vm44, %v48, 0.0
  %p51 = scmp.eq.s32.totalorder 0, 0
  // Predicated region
  $region14: #{tpu_custom_call.1} parent=0 // pred_check
    %p52 = pneg %p51
  $region15: #{tpu_custom_call.1} parent=0 // pred_check_branch
    %54 = sbr.rel (%p52) target = $region17
  $region16: #{tpu_custom_call.1} parent=0 // pred_region
    %vm55 = vcmask 7168
    %56 = vst.msk [vmem:[%s3] sm:$0xff] %vm55, %v49
    %57 = vst.msk [vmem:[%s3 + $0x8] sm:$0xff] %vm55, %v50
  $region17: #{tpu_custom_call.1} parent=0 // pred_fallthru
    _
  %p58 = scmp.ne.s32.totalorder 0, 0
  // Predicated region
  $region18: #{tpu_custom_call.1} parent=0 // pred_check
    %p59 = pneg %p58
  $region19: #{tpu_custom_call.1} parent=0 // pred_check_branch
    %61 = sbr.rel (%p59) target = $region21
  $region20: #{tpu_custom_call.1} parent=0 // pred_region
    %v62 = vld [vmem:[%s3] sm:$0xff]
    %v63 = vld [vmem:[%s3 + $0x8] sm:$0xff]
    %v64 = vadd.f32 %v62, %v49
    %v65 = vadd.f32 %v63, %v50
    %vm66 = vcmask 7168
    %67 = vst.msk [vmem:[%s3] sm:$0xff] %vm66, %v64
    %68 = vst.msk [vmem:[%s3 + $0x8] sm:$0xff] %vm66, %v65
  $region21: #{tpu_custom_call.1} parent=0 // pred_fallthru
    _
  // Predicated region
  $region22: #{tpu_custom_call.1} parent=0 // pred_check
    _
  $region23: #{tpu_custom_call.1} parent=0 // pred_check_branch
    %70 = sbr.rel (0) target = $region25
  $region24: #{tpu_custom_call.1} parent=0 // pred_region
    _
  $region25: #{tpu_custom_call.1} parent=0 // pred_fallthru
    _
  // Predicated region
  $region26: #{tpu_custom_call.1} parent=0 // pred_check
    _
  $region27: #{tpu_custom_call.1} parent=0 // pred_check_branch
    %72 = sbr.rel (0) target = $region29
  $region28: #{tpu_custom_call.1} parent=0 // pred_region
    _
  $region29: #{tpu_custom_call.1} parent=0 // pred_fallthru
    _

</llo_original>
